<compile_context>
chip_gen: v5e
topology: v5e:2x2
jax: 0.10.0
libtpu: 0.0.40
codegen_flags: <defaults>
</compile_context>

<pallas_src>
import jax
import jax.numpy as jnp
import numpy as np
from jax.experimental import pallas as pl
from jax.experimental.pallas import tpu as pltpu


# ---------------------------------------------------------------------------
# Preamble kernel: project_node  (Dropout = identity in eval, then Linear)
#   hv = node_feats @ wp.T + bp  -> stored in bf16 for the bf16 MXU path.
# ---------------------------------------------------------------------------
def _project_node_kernel(h_ref, wp_ref, bp_ref, hv_ref):
    hv = jnp.dot(h_ref[...], wp_ref[...],
                 preferred_element_type=jnp.float32) + bp_ref[...]
    hv_ref[...] = hv.astype(hv_ref.dtype)


# ---------------------------------------------------------------------------
# Main kernel: one grid point per V-tile.
#   edge softmax (per destination) -> aggregation -> elu -> fused GRU -> relu
# ---------------------------------------------------------------------------
def _attentive_gru2_kernel(
    logits_ref,   # (1, E)   f32   edge logits, lane-dense
    dst_ref,      # (TV, E)  bf16  one-hot destination incidence (tile rows)
    hsrc_ref,     # (E, H)   bf16  hv gathered at edge sources (full)
    ht_ref,       # (TV, F)  f32   previous node features (this tile)
    wg_ref,       # (H+F, 4F) f32  fused GRU weights  [r | z | gi_n | gh_n]
    bg_ref,       # (1, 4F)  f32   fused GRU biases
    out_ref,      # (TV, F)  f32   updated node features (this tile)
):
    F = out_ref.shape[1]

    logits = logits_ref[...]                                   # (1, E)
    D = dst_ref[...].astype(jnp.float32)                       # (TV, E) one-hot
    h_t = ht_ref[...]                                          # (TV, F)

    # ---- edge_softmax over edges sharing a destination ----------------------
    # Tile-rows (destinations) on sublanes, E on lanes; only E exps total.
    neg = jnp.float32(-1e30)
    colmask = jnp.sum(D, axis=0, keepdims=True)                # (1, E): dest in tile?
    masked = jnp.where(D > 0, logits, neg)                     # (TV, E)
    row_max = jnp.max(masked, axis=1, keepdims=True)           # (TV, 1) lane reduce
    # per-edge max of its destination; out-of-tile edges fall back to their own
    # logit so the exp below is exactly 1.0 (no overflow / 0*inf NaN).
    m_e = (jnp.sum(D * row_max, axis=0, keepdims=True)
           + (1.0 - colmask) * logits)                         # (1, E)
    ex_e = jnp.exp(logits - m_e)                               # (1, E)
    ex_mat = D * ex_e                                          # (TV, E)
    denom = jnp.sum(ex_mat, axis=1, keepdims=True)             # (TV, 1) lane reduce
    safe = jnp.where(denom > 0, denom, 1.0)
    att = ex_mat * pl.reciprocal(safe, approx=True)            # (TV, E); zero rows stay 0

    # ---- aggregation: (TV, E) @ (E, H) on the bf16 MXU path, f32 accumulate -
    c = jnp.dot(att.astype(jnp.bfloat16), hsrc_ref[...],
                preferred_element_type=jnp.float32)            # (TV, H)

    # ---- context = elu(c) ----------------------------------------------------
    context = jnp.where(c > 0, c, jnp.exp(c) - 1.0)

    # ---- GRUCell(context, h): single fused gate matmul -----------------------
    xh = jnp.concatenate([context, h_t], axis=1)               # (TV, H+F)
    g = jnp.dot(xh, wg_ref[...],
                preferred_element_type=jnp.float32) + bg_ref[...]   # (TV, 4F)
    r = jax.nn.sigmoid(g[:, 0:F])
    z = jax.nn.sigmoid(g[:, F:2 * F])
    gi_n = g[:, 2 * F:3 * F]
    gh_n = g[:, 3 * F:4 * F]
    n = jnp.tanh(gi_n + r * gh_n)
    h_new = (1.0 - z) * n + z * h_t

    # ---- final ReLU -----------------------------------------------------------
    out_ref[...] = jnp.maximum(h_new, 0.0)


# ---------------------------------------------------------------------------
# Wrapper: host-side layout prep + two pallas_calls.
# ---------------------------------------------------------------------------
def attentive_gru2_pallas(edge_logits, src, dst, node_feats, params, *, tile_v=128):
    V, F_ = node_feats.shape
    H = params["wp"].shape[0]
    E = edge_logits.shape[0]

    tile_v = min(tile_v, V)
    assert V % tile_v == 0, "V must be a multiple of tile_v"
    assert tile_v == V or tile_v % 16 == 0, "tile_v must be a multiple of 16 (bf16 blocks)"

    # --- layout prep (one-time host/XLA work) --------------------------------
    logits_row = edge_logits.reshape(1, E).astype(jnp.float32)                 # (1, E)
    dst_vE = (jnp.arange(V, dtype=jnp.int32)[:, None]
              == dst[None, :].astype(jnp.int32)).astype(jnp.bfloat16)          # (V, E)

    wp_t = params["wp"].T.astype(jnp.float32)                                  # (F, H)

    zHF = jnp.zeros((H, F_), jnp.float32)
    zFF = jnp.zeros((F_, F_), jnp.float32)
    wg = jnp.concatenate(
        [jnp.concatenate([params["wir"].T, params["wiz"].T, params["win"].T, zHF], axis=1),
         jnp.concatenate([params["whr"].T, params["whz"].T, zFF, params["whn"].T], axis=1)],
        axis=0)                                                                # (H+F, 4F)
    bg = jnp.concatenate([params["bir"] + params["bhr"],
                          params["biz"] + params["bhz"],
                          params["bin"], params["bhn"]], axis=1)               # (1, 4F)

    grid = (V // tile_v,)

    def full(shape):
        return pl.BlockSpec(shape, lambda i: (0, 0))

    def tiled(shape):
        return pl.BlockSpec(shape, lambda i: (i, 0))

    # --- preamble: hv = project_node(node_feats), computed ONCE ---------------
    hv = pl.pallas_call(
        _project_node_kernel,
        out_shape=jax.ShapeDtypeStruct((V, H), jnp.bfloat16),
        grid=grid,
        in_specs=[tiled((tile_v, F_)), full((F_, H)), full((1, H))],
        out_specs=tiled((tile_v, H)),
        compiler_params=pltpu.CompilerParams(dimension_semantics=("parallel",)),
    )(node_feats, wp_t, params["bp"])

    # Per-edge source gather, once, O(E*H) (was an O(E*V*H) matmul per tile).
    # TODO(synk): fold into the kernel with an index-based PrefetchScalarGridSpec
    # gather for very large graphs instead of this XLA take.
    hv_src = jnp.take(hv, src.astype(jnp.int32), axis=0)                       # (E, H) bf16

    # --- main kernel: softmax + aggregation + fused GRU, tiled over V ---------
    return pl.pallas_call(
        _attentive_gru2_kernel,
        out_shape=jax.ShapeDtypeStruct((V, F_), jnp.float32),
        grid=grid,
        in_specs=[
            full((1, E)),             # edge logits
            tiled((tile_v, E)),       # dst incidence tile (bf16)
            full((E, H)),             # hv_src (bf16)
            tiled((tile_v, F_)),      # node feats tile (GRU hidden state)
            full((H + F_, 4 * F_)),   # fused GRU weights
            full((1, 4 * F_)),        # fused GRU biases
        ],
        out_specs=tiled((tile_v, F_)),
        compiler_params=pltpu.CompilerParams(
            dimension_semantics=("parallel",),
            # Post-hoist per-step footprint is <1 MiB; 32 MiB is safe on every
            # generation (v5e/v6e 128 MiB, v7x 64 MiB physical VMEM).
            vmem_limit_bytes=32 * 1024 * 1024,
        ),
    )(logits_row, dst_vE, hv_src, node_feats, wg, bg)


# ---------------------------------------------------------------------------
# Pure-JAX reference (independent scatter/gather path, all f32)
# ---------------------------------------------------------------------------
def attentive_gru2_ref(edge_logits, src, dst, node_feats, params, V):
    logit = edge_logits[:, 0]
    hv = node_feats @ params["wp"].T + params["bp"]            # (V, H)

    m = jnp.full((V,), -jnp.inf).at[dst].max(logit)
    ex = jnp.exp(logit - m[dst])
    denom = jnp.zeros((V,)).at[dst].add(ex)
    a = ex / denom[dst]                                        # (E,)

    msg = a[:, None] * hv[src]                                 # (E, H)
    c = jnp.zeros((V, hv.shape[1])).at[dst].add(msg)           # (V, H)
    context = jnp.where(c > 0, c, jnp.expm1(c))

    h = node_feats
    r = jax.nn.sigmoid(context @ params["wir"].T + params["bir"]
                       + h @ params["whr"].T + params["bhr"])
    z = jax.nn.sigmoid(context @ params["wiz"].T + params["biz"]
                       + h @ params["whz"].T + params["bhz"])
    n = jnp.tanh(context @ params["win"].T + params["bin"]
                 + r * (h @ params["whn"].T + params["bhn"]))
    h_new = (1.0 - z) * n + z * h
    return jnp.maximum(h_new, 0.0)


# ---------------------------------------------------------------------------
# Main
# ---------------------------------------------------------------------------
if __name__ == "__main__":
    V, E = 256, 512        # nodes, edges (tile_v=128 -> grid=(2,), 2 cores on v7x)
    F_ = 32                # node_feat_size
    H = 32                 # edge_hidden_size

    key = jax.random.PRNGKey(0)
    ks = jax.random.split(key, 20)

    def unif(k, shape, bound):
        return jax.random.uniform(k, shape, jnp.float32, -bound, bound)

    # Parameter init (PyTorch-style uniform bounds); deterministic, in-script.
    bl = 1.0 / np.sqrt(F_)      # Linear(node_feat_size -> edge_hidden_size)
    bg = 1.0 / np.sqrt(F_)      # GRUCell hidden_size = node_feat_size
    params = {
        "wp":  unif(ks[0], (H, F_), bl), "bp":  unif(ks[1], (1, H), bl),
        "wir": unif(ks[2], (F_, H), bg), "wiz": unif(ks[3], (F_, H), bg),
        "win": unif(ks[4], (F_, H), bg),
        "bir": unif(ks[5], (1, F_), bg), "biz": unif(ks[6], (1, F_), bg),
        "bin": unif(ks[7], (1, F_), bg),
        "whr": unif(ks[8], (F_, F_), bg), "whz": unif(ks[9], (F_, F_), bg),
        "whn": unif(ks[10], (F_, F_), bg),
        "bhr": unif(ks[11], (1, F_), bg), "bhz": unif(ks[12], (1, F_), bg),
        "bhn": unif(ks[13], (1, F_), bg),
    }

    # Graph: ring edges guarantee every node has >= 1 incoming edge,
    # plus random extra edges.
    dst_ring = jnp.arange(V, dtype=jnp.int32)
    src_ring = (dst_ring + 1) % V
    src_rand = jax.random.randint(ks[14], (E - V,), 0, V, dtype=jnp.int32)
    dst_rand = jax.random.randint(ks[15], (E - V,), 0, V, dtype=jnp.int32)
    src = jnp.concatenate([src_ring, src_rand])
    dst = jnp.concatenate([dst_ring, dst_rand])

    edge_logits = jax.random.normal(ks[16], (E, 1), jnp.float32)
    node_feats = jax.random.normal(ks[17], (V, F_), jnp.float32)

    out = attentive_gru2_pallas(edge_logits, src, dst, node_feats, params, tile_v=128)
    out = jax.block_until_ready(out)

    ref = attentive_gru2_ref(edge_logits, src, dst, node_feats, params, V)
    # Tolerance accounts for bf16 hv / hv_src / att operands and approx reciprocal.
    np.testing.assert_allclose(np.asarray(out), np.asarray(ref), rtol=2e-2, atol=2e-2)

    print("KERNEL_OK")
</pallas_src>

<mosaic_0001>
module attributes {stable_mosaic.version = 11 : i64} {
  func.func @_project_node_kernel(%arg0: i32, %arg1: memref<128x32xf32, #tpu.memory_space<vmem>>, %arg2: memref<32x32xf32, #tpu.memory_space<vmem>>, %arg3: memref<1x32xf32, #tpu.memory_space<vmem>>, %arg4: memref<128x32xbf16, #tpu.memory_space<vmem>>) attributes {dimension_semantics = [#tpu.dimension_semantics<parallel>], iteration_bounds = array<i64: 2>, scalar_prefetch = 0 : i64, scratch_operands = 0 : i64, tpu.core_type = #tpu.core_type<tc>, window_params = [{transform_indices = @transform_0, window_bounds = array<i64: 128, 32>}, {pipeline_mode = #tpu.pipeline_mode<synchronous>, transform_indices = @transform_1, window_bounds = array<i64: 32, 32>}, {pipeline_mode = #tpu.pipeline_mode<synchronous>, transform_indices = @transform_2, window_bounds = array<i64: 1, 32>}, {transform_indices = @transform_3, window_bounds = array<i64: 128, 32>}]} {
    %c0 = arith.constant 0 : index
    %c0_0 = arith.constant 0 : index
    %0 = vector.load %arg1[%c0, %c0_0] : memref<128x32xf32, #tpu.memory_space<vmem>>, vector<128x32xf32>
    %c0_1 = arith.constant 0 : index
    %c0_2 = arith.constant 0 : index
    %1 = vector.load %arg2[%c0_1, %c0_2] : memref<32x32xf32, #tpu.memory_space<vmem>>, vector<32x32xf32>
    %cst = arith.constant dense<0.000000e+00> : vector<128x32xf32>
    %2 = tpu.matmul %0, %1, %cst {dimension_numbers = #tpu.dot_dimension_numbers<[1], [0], [0], [1], [0, 0, 1, 1], [], []>} : vector<128x32xf32>, vector<32x32xf32>, vector<128x32xf32> -> vector<128x32xf32>
    %c0_3 = arith.constant 0 : index
    %c0_4 = arith.constant 0 : index
    %3 = vector.load %arg3[%c0_3, %c0_4] : memref<1x32xf32, #tpu.memory_space<vmem>>, vector<1x32xf32>
    %4 = vector.broadcast %3 : vector<1x32xf32> to vector<128x32xf32>
    %5 = arith.addf %2, %4 : vector<128x32xf32>
    %6 = arith.truncf %5 : vector<128x32xf32> to vector<128x32xbf16>
    %c0_5 = arith.constant 0 : index
    %c0_6 = arith.constant 0 : index
    %7 = vector.load %arg4[%c0_5, %c0_6] : memref<128x32xbf16, #tpu.memory_space<vmem>>, vector<128x32xbf16>
    tpu.vector_store %arg4[%c0_5, %c0_6], %6 {strides = array<i32>} : memref<128x32xbf16, #tpu.memory_space<vmem>>, vector<128x32xbf16>,
    return
  }
  func.func @transform_0(%arg0: i32) -> (i32, i32) {
    %c0_i32 = arith.constant 0 : i32
    %c0_i32_0 = arith.constant 0 : i32
    return %arg0, %c0_i32 : i32, i32
  }
  func.func @transform_1(%arg0: i32) -> (i32, i32) {
    %c0_i32 = arith.constant 0 : i32
    %c0_i32_0 = arith.constant 0 : i32
    %c0_i32_1 = arith.constant 0 : i32
    return %c0_i32, %c0_i32_0 : i32, i32
  }
  func.func @transform_2(%arg0: i32) -> (i32, i32) {
    %c0_i32 = arith.constant 0 : i32
    %c0_i32_0 = arith.constant 0 : i32
    %c0_i32_1 = arith.constant 0 : i32
    return %c0_i32, %c0_i32_0 : i32, i32
  }
  func.func @transform_3(%arg0: i32) -> (i32, i32) {
    %c0_i32 = arith.constant 0 : i32
    %c0_i32_0 = arith.constant 0 : i32
    return %arg0, %c0_i32 : i32, i32
  }
}

</mosaic_0001>

<llo_original>
// kernel: tpu_custom_call.1
$region0: #{tpu_custom_call.1}
  #allocation0 [shape = 'u32[]', space=smem, size = 0x4, offset = 0x4, fixed_abs, tag = 'smem constant byte address 0x4 - core index']
  #allocation1 [shape = 'u32[72,128]{1,0:T(1,128)}', space=vmem, size = 0x9000, scoped, tag = 'internal scratch']
  %s0 = inlined_call_operand.vmem [shape: f32[256,32], index: 0, kind: input, shape index: {}]
  %s1 = inlined_call_operand.vmem [shape: f32[32,32], index: 1, kind: input, shape index: {}]
  %s2 = inlined_call_operand.vmem [shape: f32[1,32], index: 2, kind: input, shape index: {}]
  %s3 = inlined_call_operand.vmem [shape: bf16[256,32], index: 3, kind: output, shape index: {}]
  %s4 = sld [smem:[#allocation0]]
  $region45: #{tpu_custom_call.1} parent=0
    _
  %s6 = ssub.s32 1, %s4
  %s7 = scalar_select 0, %s6, %s4
  loop: start=0, step=1, limit=4
  $region2: #{tpu_custom_call.1} parent=0 // loop_pre_header
    _
  $region3: #{tpu_custom_call.1} parent=0 // loop_header
    %s9 = sphi 0, %s13
    %p10 = scmp.ge.s32.totalorder %s9, 4
    %s19 = sphi 0, %s21
    %s22 = sphi 0, %s19
    %s23 = sphi 0, %s22
    %s39 = sphi 0, %s23
    %s43 = sphi 0, %s43
    %s45 = sphi 0, %s43
    %s46 = sphi 0, %s45
    %s60 = sphi 0, %s46
    %s64 = sphi 0, %s64
    %s66 = sphi 0, %s64
    %s67 = sphi 0, %s66
    %s81 = sphi 0, %s67
    %s87 = sphi 0, %s89
    %s90 = sphi 0, %s87
    %s91 = sphi 0, %s90
    %s107 = sphi 0, %s91
  $region4: #{tpu_custom_call.1} parent=0 // loop_header_branch
    %12 = sbr.rel (%p10) target = $region8
  $region5: #{tpu_custom_call.1} parent=0 // loop_body
    %s14 = ssub.s32 %s9, 1
    %s15 = ssub.s32 %s9, 2
    %s16 = sadd.s32 %s9, 1
    %s17 = ssub.s32 %s9, %s16
    %p18 = scmp.eq.s32.totalorder %s17, 0
    %s20 = sadd.s32 %s19, 1
    %s21 = scalar_select %p18, %s19, %s20
    %p24 = pneg %p18
    %p25 = scmp.eq.s32.totalorder %s9, 1
    %p26 = por %p24, %p25
    %p27 = scmp.ne.s32.totalorder %s19, %s22
    %p28 = scmp.eq.s32.totalorder %s9, 0
    %p29 = por %p27, %p28
    %p30 = scmp.ne.s32.totalorder %s19, %s22
    %p31 = scmp.eq.s32.totalorder %s14, 1
    %p32 = por %p30, %p31
    %p33 = scmp.ne.s32.totalorder %s22, %s23
    %p34 = scmp.eq.s32.totalorder %s14, 0
    %p35 = por %p33, %p34
    %p36 = scmp.ne.s32.totalorder %s22, %s23
    %p37 = scmp.eq.s32.totalorder %s15, 1
    %p38 = por %p36, %p37
    %p40 = scmp.ne.s32.totalorder %s23, %s39
    %p41 = scmp.eq.s32.totalorder %s15, 0
    %p42 = por %p40, %p41
    %s44 = sadd.s32 %s43, 1
    %p47 = scmp.eq.s32.totalorder %s9, 1
    %p48 = scmp.ne.s32.totalorder %s43, %s45
    %p49 = scmp.eq.s32.totalorder %s9, 0
    %p50 = por %p48, %p49
    %p51 = scmp.ne.s32.totalorder %s43, %s45
    %p52 = scmp.eq.s32.totalorder %s14, 1
    %p53 = por %p51, %p52
    %p54 = scmp.ne.s32.totalorder %s45, %s46
    %p55 = scmp.eq.s32.totalorder %s14, 0
    %p56 = por %p54, %p55
    %p57 = scmp.ne.s32.totalorder %s45, %s46
    %p58 = scmp.eq.s32.totalorder %s15, 1
    %p59 = por %p57, %p58
    %p61 = scmp.ne.s32.totalorder %s46, %s60
    %p62 = scmp.eq.s32.totalorder %s15, 0
    %p63 = por %p61, %p62
    %s65 = sadd.s32 %s64, 1
    %p68 = scmp.eq.s32.totalorder %s9, 1
    %p69 = scmp.ne.s32.totalorder %s64, %s66
    %p70 = scmp.eq.s32.totalorder %s9, 0
    %p71 = por %p69, %p70
    %p72 = scmp.ne.s32.totalorder %s64, %s66
    %p73 = scmp.eq.s32.totalorder %s14, 1
    %p74 = por %p72, %p73
    %p75 = scmp.ne.s32.totalorder %s66, %s67
    %p76 = scmp.eq.s32.totalorder %s14, 0
    %p77 = por %p75, %p76
    %p78 = scmp.ne.s32.totalorder %s66, %s67
    %p79 = scmp.eq.s32.totalorder %s15, 1
    %p80 = por %p78, %p79
    %p82 = scmp.ne.s32.totalorder %s67, %s81
    %p83 = scmp.eq.s32.totalorder %s15, 0
    %p84 = por %p82, %p83
    %s85 = ssub.s32 %s9, %s16
    %p86 = scmp.eq.s32.totalorder %s85, 0
    %s88 = sadd.s32 %s87, 1
    %s89 = scalar_select %p86, %s87, %s88
    %p92 = pneg %p86
    %p93 = scmp.eq.s32.totalorder %s9, 1
    %p94 = por %p92, %p93
    %p95 = scmp.ne.s32.totalorder %s87, %s90
    %p96 = scmp.eq.s32.totalorder %s9, 0
    %p97 = por %p95, %p96
    %p98 = scmp.ne.s32.totalorder %s87, %s90
    %p99 = scmp.eq.s32.totalorder %s14, 1
    %p100 = por %p98, %p99
    %p101 = scmp.ne.s32.totalorder %s90, %s91
    %p102 = scmp.eq.s32.totalorder %s14, 0
    %p103 = por %p101, %p102
    %p104 = scmp.ne.s32.totalorder %s90, %s91
    %p105 = scmp.eq.s32.totalorder %s15, 1
    %p106 = por %p104, %p105
    %p108 = scmp.ne.s32.totalorder %s91, %s107
    %p109 = scmp.eq.s32.totalorder %s15, 0
    %p110 = por %p108, %p109
    %p111 = scmp.le.s32.totalorder 1, %s9
    %p112 = scmp.lt.s32.totalorder %s9, 3
    %p113 = pnand %p111, %p112
    %p114 = pneg %p113
    // Predicated region
    $region9: #{tpu_custom_call.1} parent=5 // pred_check
      _
    $region10: #{tpu_custom_call.1} parent=5 // pred_check_branch
      %116 = sbr.rel (%p113) target = $region12
    $region11: #{tpu_custom_call.1} parent=5 // pred_region
      %s117 = ssub.s32 %s9, 1
      // Predicated region
      $region13: #{tpu_custom_call.1} parent=11 // pred_check
        %p118 = pneg %p56
      $region14: #{tpu_custom_call.1} parent=11 // pred_check_branch
        %120 = sbr.rel (%p118) target = $region16
      $region15: #{tpu_custom_call.1} parent=11 // pred_region
        _
      $region16: #{tpu_custom_call.1} parent=11 // pred_fallthru
        _
      // Predicated region
      $region17: #{tpu_custom_call.1} parent=11 // pred_check
        %p121 = pneg %p77
      $region18: #{tpu_custom_call.1} parent=11 // pred_check_branch
        %123 = sbr.rel (%p121) target = $region20
      $region19: #{tpu_custom_call.1} parent=11 // pred_region
        _
      $region20: #{tpu_custom_call.1} parent=11 // pred_fallthru
        _
    $region12: #{tpu_custom_call.1} parent=5 // pred_fallthru
      _
    %p124 = scmp.lt.s32.totalorder %s9, 2
    // Predicated region
    $region21: #{tpu_custom_call.1} parent=5 // pred_check
      %p125 = pneg %p124
    $region22: #{tpu_custom_call.1} parent=5 // pred_check_branch
      %127 = sbr.rel (%p125) target = $region24
    $region23: #{tpu_custom_call.1} parent=5 // pred_region
      // Predicated region
      $region25: #{tpu_custom_call.1} parent=23 // pred_check
        %p128 = pneg %p29
      $region26: #{tpu_custom_call.1} parent=23 // pred_check_branch
        %130 = sbr.rel (%p128) target = $region28
      $region27: #{tpu_custom_call.1} parent=23 // pred_region
        %s131 = smul.u32 16, %s9
        %p132 = scmp.lt.s32.totalorder %s131, 31
        %s133 = scalar_select %p132, %s131, 31
        %s134 = smul.addr %s133, 8
        %s135 = scalar_lea.vmem %s0, %s134
        %s136 = smul.u32 16, %s9
      $region28: #{tpu_custom_call.1} parent=23 // pred_fallthru
        _
    $region24: #{tpu_custom_call.1} parent=5 // pred_fallthru
      _
    %p137 = scmp.le.s32.totalorder 1, %s9
    %p138 = scmp.lt.s32.totalorder %s9, 3
    %p139 = pnand %p137, %p138
    %p140 = pneg %p139
    // Predicated region
    $region29: #{tpu_custom_call.1} parent=5 // pred_check
      _
    $region30: #{tpu_custom_call.1} parent=5 // pred_check_branch
      %142 = sbr.rel (%p139) target = $region32
    $region31: #{tpu_custom_call.1} parent=5 // pred_region
      %s143 = ssub.s32 %s9, 1
      %s144 = smul.u32 16, %s14
      %p145 = scmp.lt.s32.totalorder %s144, 31
      %s146 = scalar_select %p145, %s144, 31
      %s147 = smul.addr %s146, 8
      %s148 = scalar_lea.vmem %s0, %s147
      %p149 = pneg %p35
      %p150 = pneg %p32
      %p151 = pneg %p56
      %p152 = pneg %p53
      %p153 = pneg %p77
      %p154 = pneg %p74
      %p155 = pneg %p103
      %p156 = pneg %p100
      %s157 = smul.u32 16, %s14
      %p158 = scmp.lt.s32.totalorder %s157, 31
      %s159 = scalar_select %p158, %s157, 31
      %s160 = smul.addr %s159, 4
      %s161 = scalar_lea.vmem %s3, %s160
      %s162 = smul.u32 16, %s14
      %p163 = scmp.lt.s32.totalorder %s162, 31
      %s164 = scalar_select %p163, %s162, 31
      %s165 = smul.addr %s164, 8
      %s166 = scalar_lea.vmem %s0, %s165
      %s167 = smul.u32 16, %s14
      %s168 = smul.u32 16, %s14
      %p169 = scmp.lt.s32.totalorder %s168, 31
      %s170 = scalar_select %p169, %s168, 31
      %s171 = smul.addr %s170, 4
      %s172 = scalar_lea.vmem %s3, %s171
      %s173 = smul.u32 16, %s14
      %v174 = vld [vmem:[%s166] sm:$0xff]
      %v175 = vld [vmem:[%s166 + $0x8] sm:$0xff]
      %v176 = vld [vmem:[%s166 + $0x10] sm:$0xff]
      %v177 = vld [vmem:[%s166 + $0x18] sm:$0xff]
      %v178 = vld [vmem:[%s166 + $0x20] sm:$0xff]
      %v179 = vld [vmem:[%s166 + $0x28] sm:$0xff]
      %v180 = vld [vmem:[%s166 + $0x30] sm:$0xff]
      %v181 = vld [vmem:[%s166 + $0x38] sm:$0xff]
      %v182 = vld [vmem:[%s166 + $0x40] sm:$0xff]
      %v183 = vld [vmem:[%s166 + $0x48] sm:$0xff]
      %v184 = vld [vmem:[%s166 + $0x50] sm:$0xff]
      %v185 = vld [vmem:[%s166 + $0x58] sm:$0xff]
      %v186 = vld [vmem:[%s166 + $0x60] sm:$0xff]
      %v187 = vld [vmem:[%s166 + $0x68] sm:$0xff]
      %v188 = vld [vmem:[%s166 + $0x70] sm:$0xff]
      %v189 = vld [vmem:[%s166 + $0x78] sm:$0xff]
      %v190 = vld [vmem:[%s1] sm:$0xff]
      %v191 = vld [vmem:[%s1 + $0x8] sm:$0xff]
      %v192 = vld [vmem:[%s1 + $0x10] sm:$0xff]
      %v193 = vld [vmem:[%s1 + $0x18] sm:$0xff]
      %v194 = vld [vmem:[%s2] sm:$0x1]
      %v196 = vperm.slane %v194, 0
      %vm198 = vcmask 261120
      %v200 = vsel %vm198, %v174, 0
      %v203 = vsel %vm198, %v175, 0
      %v206 = vsel %vm198, %v176, 0
      %v209 = vsel %vm198, %v177, 0
      %v212 = vsel %vm198, %v178, 0
      %v215 = vsel %vm198, %v179, 0
      %v218 = vsel %vm198, %v180, 0
      %v221 = vsel %vm198, %v181, 0
      %v224 = vsel %vm198, %v182, 0
      %v227 = vsel %vm198, %v183, 0
      %v230 = vsel %vm198, %v184, 0
      %v233 = vsel %vm198, %v185, 0
      %v236 = vsel %vm198, %v186, 0
      %v239 = vsel %vm198, %v187, 0
      %v242 = vsel %vm198, %v188, 0
      %v245 = vsel %vm198, %v189, 0
      %247 = vmatpush.msra.mxu0 0.0
      %248 = vmatpush.msra.mxu0 0.0
      %249 = vmatpush.msra.mxu0 0.0
      %250 = vmatpush.msra.mxu0 0.0
      %251 = vmatpush.msra.mxu0 0.0
      %252 = vmatpush.msra.mxu0 0.0
      %253 = vmatpush.msra.mxu0 0.0
      %254 = vmatpush.msra.mxu0 0.0
      %255 = vmatpush.msra.mxu0 0.0
      %256 = vmatpush.msra.mxu0 0.0
      %257 = vmatpush.msra.mxu0 0.0
      %258 = vmatpush.msra.mxu0 0.0
      %259 = vmatpush.msra.mxu0 %v193
      %260 = vmatpush.msra.mxu0 %v192
      %261 = vmatpush.msra.mxu0 %v191
      %262 = vmatpush.msra.mxu0 %v190
      %263 = vmatmul.f32.gmra.mxu0 %v200
      %v264 = vpop.f32.mrf.mxu0
      %v265 = vadd.f32 %v196, %v264
      %266 = vmatmul.f32.gmra.mxu0 %v203
      %v267 = vpop.f32.mrf.mxu0
      %v268 = vadd.f32 %v196, %v267
      %269 = vmatmul.f32.gmra.mxu0 %v206
      %v270 = vpop.f32.mrf.mxu0
      %v271 = vadd.f32 %v196, %v270
      %272 = vmatmul.f32.gmra.mxu0 %v209
      %v273 = vpop.f32.mrf.mxu0
      %v274 = vadd.f32 %v196, %v273
      %275 = vmatmul.f32.gmra.mxu0 %v212
      %v276 = vpop.f32.mrf.mxu0
      %v277 = vadd.f32 %v196, %v276
      %278 = vmatmul.f32.gmra.mxu0 %v215
      %v279 = vpop.f32.mrf.mxu0
      %v280 = vadd.f32 %v196, %v279
      %281 = vmatmul.f32.gmra.mxu0 %v218
      %v282 = vpop.f32.mrf.mxu0
      %v283 = vadd.f32 %v196, %v282
      %284 = vmatmul.f32.gmra.mxu0 %v221
      %v285 = vpop.f32.mrf.mxu0
      %v286 = vadd.f32 %v196, %v285
      %287 = vmatmul.f32.gmra.mxu0 %v224
      %v288 = vpop.f32.mrf.mxu0
      %v289 = vadd.f32 %v196, %v288
      %290 = vmatmul.f32.gmra.mxu0 %v227
      %v291 = vpop.f32.mrf.mxu0
      %v292 = vadd.f32 %v196, %v291
      %293 = vmatmul.f32.gmra.mxu0 %v230
      %v294 = vpop.f32.mrf.mxu0
      %v295 = vadd.f32 %v196, %v294
      %296 = vmatmul.f32.gmra.mxu0 %v233
      %v297 = vpop.f32.mrf.mxu0
      %v298 = vadd.f32 %v196, %v297
      %299 = vmatmul.f32.gmra.mxu0 %v236
      %v300 = vpop.f32.mrf.mxu0
      %v301 = vadd.f32 %v196, %v300
      %302 = vmatmul.f32.gmra.mxu0 %v239
      %v303 = vpop.f32.mrf.mxu0
      %v304 = vadd.f32 %v196, %v303
      %305 = vmatmul.f32.gmra.mxu0 %v242
      %v306 = vpop.f32.mrf.mxu0
      %v307 = vadd.f32 %v196, %v306
      %308 = vmatmul.f32.gmra.mxu0 %v245
      %v309 = vpop.f32.mrf.mxu0
      %v310 = vadd.f32 %v196, %v309
      %311 = vdwg.mxu0
      %v312 = vpack.c.bf16 %v265, %v265
      %v313 = vpack.c.bf16 %v268, %v268
      %v314 = vpack.c.bf16 %v271, %v271
      %v315 = vpack.c.bf16 %v274, %v274
      %v316 = vpack.c.bf16 %v277, %v277
      %v317 = vpack.c.bf16 %v280, %v280
      %v318 = vpack.c.bf16 %v283, %v283
      %v319 = vpack.c.bf16 %v286, %v286
      %v320 = vpack.c.bf16 %v289, %v289
      %v321 = vpack.c.bf16 %v292, %v292
      %v322 = vpack.c.bf16 %v295, %v295
      %v323 = vpack.c.bf16 %v298, %v298
      %v324 = vpack.c.bf16 %v301, %v301
      %v325 = vpack.c.bf16 %v304, %v304
      %v326 = vpack.c.bf16 %v307, %v307
      %v327 = vpack.c.bf16 %v310, %v310
      %vm328 = vcmask 257024
      %329 = vst.msk [vmem:[%s172] sm:$0xf] %vm328, %v312
      %330 = vst.msk [vmem:[%s172 + $0x4] sm:$0xf] %vm328, %v313
      %331 = vst.msk [vmem:[%s172 + $0x8] sm:$0xf] %vm328, %v314
      %332 = vst.msk [vmem:[%s172 + $0xc] sm:$0xf] %vm328, %v315
      %333 = vst.msk [vmem:[%s172 + $0x10] sm:$0xf] %vm328, %v316
      %334 = vst.msk [vmem:[%s172 + $0x14] sm:$0xf] %vm328, %v317
      %335 = vst.msk [vmem:[%s172 + $0x18] sm:$0xf] %vm328, %v318
      %336 = vst.msk [vmem:[%s172 + $0x1c] sm:$0xf] %vm328, %v319
      %337 = vst.msk [vmem:[%s172 + $0x20] sm:$0xf] %vm328, %v320
      %338 = vst.msk [vmem:[%s172 + $0x24] sm:$0xf] %vm328, %v321
      %339 = vst.msk [vmem:[%s172 + $0x28] sm:$0xf] %vm328, %v322
      %340 = vst.msk [vmem:[%s172 + $0x2c] sm:$0xf] %vm328, %v323
      %341 = vst.msk [vmem:[%s172 + $0x30] sm:$0xf] %vm328, %v324
      %342 = vst.msk [vmem:[%s172 + $0x34] sm:$0xf] %vm328, %v325
      %343 = vst.msk [vmem:[%s172 + $0x38] sm:$0xf] %vm328, %v326
      %344 = vst.msk [vmem:[%s172 + $0x3c] sm:$0xf] %vm328, %v327
      %s345 = smul.u32 16, %s14
      %p346 = scmp.lt.s32.totalorder %s345, 31
      %s347 = scalar_select %p346, %s345, 31
      %s348 = smul.addr %s347, 4
      %s349 = scalar_lea.vmem %s3, %s348
      // Predicated region
      $region33: #{tpu_custom_call.1} parent=31 // pred_check
        %p350 = pneg %p100
      $region34: #{tpu_custom_call.1} parent=31 // pred_check_branch
        %352 = sbr.rel (%p350) target = $region36
      $region35: #{tpu_custom_call.1} parent=31 // pred_region
        %s353 = smul.u32 16, %s14
      $region36: #{tpu_custom_call.1} parent=31 // pred_fallthru
        _
    $region32: #{tpu_custom_call.1} parent=5 // pred_fallthru
      _
    %p354 = scmp.le.s32.totalorder 2, %s9
    // Predicated region
    $region37: #{tpu_custom_call.1} parent=5 // pred_check
      %p355 = pneg %p354
    $region38: #{tpu_custom_call.1} parent=5 // pred_check_branch
      %357 = sbr.rel (%p355) target = $region40
    $region39: #{tpu_custom_call.1} parent=5 // pred_region
      %s358 = ssub.s32 %s9, 2
      // Predicated region
      $region41: #{tpu_custom_call.1} parent=39 // pred_check
        %p359 = pneg %p106
      $region42: #{tpu_custom_call.1} parent=39 // pred_check_branch
        %361 = sbr.rel (%p359) target = $region44
      $region43: #{tpu_custom_call.1} parent=39 // pred_region
        %s362 = smul.u32 16, %s15
        %p363 = scmp.lt.s32.totalorder %s362, 31
        %s364 = scalar_select %p363, %s362, 31
        %s365 = smul.addr %s364, 4
        %s366 = scalar_lea.vmem %s3, %s365
      $region44: #{tpu_custom_call.1} parent=39 // pred_fallthru
        _
    $region40: #{tpu_custom_call.1} parent=5 // pred_fallthru
      _
  $region6: #{tpu_custom_call.1} parent=0 // loop_footer
    %s13 = sadd.s32 1, %s9
  $region7: #{tpu_custom_call.1} parent=0 // loop_footer_branch
    %8 = sbr.rel target = $region3
  $region8: #{tpu_custom_call.1} parent=0 // loop_exit
    _

</llo_original>
